<compile_context>
chip_gen: v7x
topology: tpu7x:2x2x1
jax: 0.10.0
libtpu: 0.0.40
codegen_flags: <defaults>
</compile_context>

<pallas_src>
import functools

import jax
import jax.numpy as jnp
from jax import lax
from jax.experimental import pallas as pl
from jax.experimental.pallas import tpu as pltpu

EPS = 1e-6  # nn.PairwiseDistance default eps


def _som_kernel(params_ref, x_ref, w_ref, loss_ref, wout_ref,
                lrloc_ref, lrsum_ref, min2_ref, arg_ref,
                *, n_neurons, n_cols, d_true, batch, mask_d):
    phase = pl.program_id(0)
    d_idx = pl.program_id(1)
    tile_d = w_ref.shape[0]
    m_pad = w_ref.shape[1]

    # --------------- phase 0: BMU search (reduction over feature tiles) -------
    @pl.when(phase == 0)
    def _bmu_phase():
        @pl.when(d_idx == 0)
        def _init():
            min2_ref[...] = jnp.full(min2_ref.shape, jnp.inf, min2_ref.dtype)
            arg_ref[...] = jnp.zeros(arg_ref.shape, arg_ref.dtype)

        xe = x_ref[...] + EPS                                # (B, tile_d)
        w = w_ref[...]                                       # (tile_d, Mp)

        # dist2[b, d] = sum_m (x[b,d]+eps - w[d,m])^2
        #             = M*(xe - c)^2 + (s2 - s1*c),   c = s1 / M
        # One pass over w (no centred (tile_d, M) temp); zero-padded neuron
        # columns do not perturb s1/s2 because the multiplier is the true M.
        s1 = jnp.sum(w, axis=1, keepdims=True)               # (tile_d, 1)
        s2 = jnp.sum(w * w, axis=1, keepdims=True)           # (tile_d, 1)
        c = s1 * (1.0 / n_neurons)
        varsum = jnp.maximum(s2 - s1 * c, 0.0)               # clamp mild cancellation
        c_row = jnp.transpose(c)                             # (1, tile_d)
        v_row = jnp.transpose(varsum)                        # (1, tile_d)

        t = xe - c_row
        d2 = float(n_neurons) * (t * t) + v_row              # (B, tile_d) lane-dense

        g = lax.broadcasted_iota(jnp.int32, d2.shape, 1) + d_idx * tile_d
        if mask_d:  # static: only when D was padded up to the tile size
            d2 = jnp.where(g < d_true, d2, jnp.inf)

        # running min / first-occurrence argmin over the feature axis
        tile_min = jnp.min(d2, axis=1, keepdims=True)        # (B, 1)
        tile_arg = jnp.min(jnp.where(d2 == tile_min, g, jnp.int32(2 ** 30)),
                           axis=1, keepdims=True)            # (B, 1) global index

        better = tile_min < min2_ref[...]
        arg_ref[...] = jnp.where(better, tile_arg, arg_ref[...])
        min2_ref[...] = jnp.where(better, tile_min, min2_ref[...])

        @pl.when(d_idx == pl.num_programs(1) - 1)
        def _finalize():
            lr = params_ref[0]                               # SMEM scalars
            inv_sigma2 = params_ref[1]

            # loss = mean_b sqrt(min_d dist2): sqrt deferred to the B minima only
            loss_ref[0, 0] = jnp.sum(jnp.sqrt(min2_ref[...])) * (1.0 / batch)

            # BMU grid coordinates by integer decode of the canonical row-major
            # (i, j) grid (exactly what SOM.neuron_locations builds). Clamp like
            # the JAX reference when the BMU (feature) index exceeds m*n.
            idx = jnp.minimum(arg_ref[...], n_neurons - 1).astype(jnp.float32)
            n_f = float(n_cols)
            bmu_i = jnp.floor(idx / n_f)      # exact for small integer-valued floats
            bmu_j = idx - bmu_i * n_f                         # (B, 1)

            m_iota = lax.broadcasted_iota(jnp.int32, (1, m_pad), 1)
            m_f = m_iota.astype(jnp.float32)
            loc_i = jnp.floor(m_f / n_f)                      # (1, Mp)
            loc_j = m_f - loc_i * n_f

            di = loc_i - bmu_i                                # (B, Mp)
            dj = loc_j - bmu_j
            lrl = jnp.exp((di * di + dj * dj) * (-inv_sigma2)) * lr
            lrl = jnp.where(m_iota < n_neurons, lrl, 0.0)     # zero padded neurons
            lrloc_ref[...] = lrl                              # stays in VMEM
            lrsum_ref[...] = jnp.sum(lrl, axis=0, keepdims=True)  # hoisted once

    # --------------- phase 1: weight update (in-place via aliasing) -----------
    @pl.when(phase == 1)
    def _update_phase():
        w = w_ref[...]                                        # (tile_d, Mp)
        lrl = lrloc_ref[...]                                  # (B, Mp)
        xt = jnp.transpose(x_ref[...])                        # (tile_d, B)
        if batch <= 8:
            # Tiny batch: unrolled VPU MAC (exact f32, matches the reference sum).
            delta = lrl[0:1, :] * (xt[:, 0:1] - w)
            for b in range(1, batch):
                delta = delta + lrl[b:b + 1, :] * (xt[:, b:b + 1] - w)
        else:
            # Layout-native (tile_d, B) @ (B, Mp) MXU contraction, with
            # sum_b lr_loc hoisted to the phase-0 finalize.
            xl = jnp.dot(xt, lrl, preferred_element_type=jnp.float32)
            delta = xl - w * lrsum_ref[...]
        wout_ref[...] = w + delta * (1.0 / batch)


def _round_up(x, mult):
    return ((x + mult - 1) // mult) * mult


def _vmem_budget_bytes():
    cap = 64 << 20
    try:
        info = pltpu.get_tpu_info()
        cap = int(getattr(info, "vmem_capacity_bytes", cap))
    except Exception:
        pass
    # ~3/4 of physical VMEM: ~48 MiB on v7x (64 MiB/TC), ~96 MiB on v5e/v6e (128 MiB)
    return max(16 << 20, (cap * 3) // 4)


def _need_bytes(tile_d, batch, m_pad):
    blocks = 2 * 4 * tile_d * (batch + 2 * m_pad)    # double-buffered x, w-in, w-out
    temps = 4 * tile_d * (m_pad + 6 * batch)         # w*w + d2/t/iota temporaries
    resident = 4 * (2 * batch * m_pad + 2 * m_pad + 16 * batch)
    return blocks + temps + resident + (2 << 20)


def _choose_tiling(D, batch, m_pad, budget):
    """Returns (tile_d, padded_D, mask_needed)."""
    if _need_bytes(D, batch, m_pad) <= budget:
        return D, D, False                    # single full-D block: weights read once
    for td in (2048, 1024, 512, 256, 128):
        if D % td == 0 and _need_bytes(td, batch, m_pad) <= budget:
            return td, D, False
    for td in (2048, 1024, 512, 256, 128):    # large irregular D: pad + mask tail
        if _need_bytes(td, batch, m_pad) <= budget:
            return td, _round_up(D, td), True
    return 128, _round_up(D, 128), True


@functools.partial(jax.jit, static_argnames=("n_cols", "alpha", "sigma0", "niter"))
def som_forward(x, weights, current_iter, *, n_cols, alpha, sigma0, niter):
    """Fused Pallas SOM step. Returns (loss, updated_weights).

    `current_iter` may be a Python int or a traced scalar: the schedule
    (lr, 1/sigma^2) is computed with jnp and handed to the kernel via SMEM, so
    training steps never retrace/recompile this function.
    """
    B = x.shape[0]
    x2 = x.reshape(B, -1).astype(jnp.float32)        # (B, D), natural layout
    D, M = weights.shape
    assert x2.shape[1] == D, "flattened input must equal in_dim"

    # schedule scalars (traced, NOT baked into the kernel)
    iter_corr = 1.0 - current_iter / niter
    lr = alpha * iter_corr
    sigma = sigma0 * iter_corr
    inv_sigma2 = 1.0 / (sigma * sigma)
    params = jnp.stack([lr, inv_sigma2]).astype(jnp.float32)

    # lane-dense neuron axis; VMEM-budget-aware tiling of the feature axis
    m_pad = _round_up(M, 128)
    budget = _vmem_budget_bytes()
    tile_d, d_pad, mask_d = _choose_tiling(D, B, m_pad, budget)

    w32 = weights.astype(jnp.float32)
    if (d_pad != D) or (m_pad != M):
        # TODO(synk): a production training loop should keep the weights stored
        # padded to (d_pad, m_pad) so this pad/slice pair happens once, not per step.
        w32 = jnp.pad(w32, ((0, d_pad - D), (0, m_pad - M)))
    xp = x2 if d_pad == D else jnp.pad(x2, ((0, 0), (0, d_pad - D)))

    nd = d_pad // tile_d
    kernel = functools.partial(_som_kernel, n_neurons=M, n_cols=n_cols,
                               d_true=D, batch=B, mask_d=mask_d)

    # TODO(synk): on v7x a core_map batch split of phase 0 would use both
    # TensorCores; the fused grid below runs sequentially on one TC.
    loss, new_w = pl.pallas_call(
        kernel,
        grid=(2, nd),                                        # (phase, feature tile)
        in_specs=[
            pl.BlockSpec(memory_space=pltpu.MemorySpace.SMEM),      # [lr, 1/sigma^2]
            pl.BlockSpec((B, tile_d), lambda p, d: (0, d)),         # x tile
            pl.BlockSpec((tile_d, m_pad), lambda p, d: (d, 0)),     # weights tile
        ],
        out_specs=(
            pl.BlockSpec(memory_space=pltpu.MemorySpace.SMEM),      # scalar loss
            # phase 0 parks on block 0 (no spurious writebacks); phase 1 walks d
            pl.BlockSpec((tile_d, m_pad), lambda p, d: (p * d, 0)),
        ),
        out_shape=(
            jax.ShapeDtypeStruct((1, 1), jnp.float32),
            jax.ShapeDtypeStruct((d_pad, m_pad), jnp.float32),
        ),
        scratch_shapes=[
            pltpu.VMEM((B, m_pad), jnp.float32),   # lr_loc (resident, never hits HBM)
            pltpu.VMEM((1, m_pad), jnp.float32),   # sum_b lr_loc (hoisted)
            pltpu.VMEM((B, 1), jnp.float32),       # running min dist^2 per sample
            pltpu.VMEM((B, 1), jnp.int32),         # running argmin per sample
        ],
        input_output_aliases={2: 1},               # weights buffer updated in place
        compiler_params=pltpu.CompilerParams(
            dimension_semantics=("arbitrary", "arbitrary"),
            vmem_limit_bytes=budget,
        ),
    )(params, xp, w32)

    if (d_pad != D) or (m_pad != M):
        new_w = new_w[:D, :M]
    return loss[0, 0], new_w


def som_forward_ref(x, weights, locations, *, alpha, sigma0, niter, current_iter):
    """Pure-JAX reference mirroring the PyTorch forward exactly."""
    B = x.shape[0]
    xv = x.reshape(B, -1, 1).astype(jnp.float32)                # (B, D, 1)
    w = weights.astype(jnp.float32)                             # (D, M)
    diff = xv - w[None, :, :] + EPS                             # (B, D, M)
    dists = jnp.sqrt(jnp.sum(diff * diff, axis=-1))             # (B, D)
    loss_per = jnp.min(dists, axis=1)                           # (B,)
    bmu_index = jnp.argmin(dists, axis=1)                       # (B,)
    bmu_loc = locations[bmu_index][:, None, :].astype(jnp.float32)   # (B, 1, 2)
    iter_corr = 1.0 - float(current_iter) / float(niter)
    lr = alpha * iter_corr
    sigma = sigma0 * iter_corr
    dsq = jnp.sum((locations.astype(jnp.float32)[None] - bmu_loc) ** 2, axis=2)  # (B, M)
    lr_loc = jnp.exp(-(dsq / (sigma ** 2))) * lr                # (B, M)
    delta = jnp.sum(lr_loc[:, None, :] * (xv - w[None, :, :]), axis=0) / B
    return jnp.sum(loss_per) / B, w + delta


if __name__ == "__main__":
    key = jax.random.PRNGKey(0)
    m, n = 8, 8                 # SOM grid -> m*n = 64 neurons
    in_dim = 2 * 4 * 4          # flattened input dim = 32
    niter = 100
    alpha = 0.3
    sigma0 = max(m, n) / 2.0
    B = 2

    kx, kw = jax.random.split(key)
    x = jax.random.normal(kx, (B, 2, 4, 4), dtype=jnp.float32)            # NCHW-style input
    weights0 = jax.random.normal(kw, (in_dim, m * n), dtype=jnp.float32)  # torch.randn(in_dim, m*n)
    locations = jnp.array([(i, j) for i in range(m) for j in range(n)],
                          dtype=jnp.int32)                                # (m*n, 2)

    # Two consecutive training steps through the SAME compiled kernel (lr/sigma
    # arrive via SMEM, so the second step does not retrace).
    w_k = weights0
    w_r = weights0
    for it in (5, 6):
        loss_k, w_k = som_forward(x, w_k, it, n_cols=n, alpha=alpha,
                                  sigma0=sigma0, niter=niter)
        jax.block_until_ready((loss_k, w_k))
        loss_r, w_r = som_forward_ref(x, w_r, locations, alpha=alpha, sigma0=sigma0,
                                      niter=niter, current_iter=it)
        jax.block_until_ready((loss_r, w_r))
        assert jnp.allclose(loss_k, loss_r, rtol=2e-3, atol=2e-3), (it, loss_k, loss_r)
        assert jnp.allclose(w_k, w_r, rtol=2e-3, atol=2e-3), it

    print("KERNEL_OK")
</pallas_src>

<mosaic_0001>
module attributes {stable_mosaic.version = 11 : i64} {
  func.func @_som_kernel(%arg0: i32, %arg1: i32, %arg2: memref<2xf32, #tpu.memory_space<smem>>, %arg3: memref<2x32xf32, #tpu.memory_space<vmem>>, %arg4: memref<32x128xf32, #tpu.memory_space<vmem>>, %arg5: memref<1x1xf32, #tpu.memory_space<smem>>, %arg6: memref<32x128xf32, #tpu.memory_space<vmem>>, %arg7: memref<2x128xf32, #tpu.memory_space<vmem>>, %arg8: memref<1x128xf32, #tpu.memory_space<vmem>>, %arg9: memref<2x1xf32, #tpu.memory_space<vmem>>, %arg10: memref<2x1xi32, #tpu.memory_space<vmem>>) attributes {dimension_semantics = [#tpu.dimension_semantics<arbitrary>, #tpu.dimension_semantics<arbitrary>], iteration_bounds = array<i64: 2, 1>, scalar_prefetch = 0 : i64, scratch_operands = 4 : i64, tpu.core_type = #tpu.core_type<tc>, window_params = [{transform_indices = @transform_0, window_bounds = array<i64: 2>}, {transform_indices = @transform_1, window_bounds = array<i64: 2, 32>}, {transform_indices = @transform_2, window_bounds = array<i64: 32, 128>}, {transform_indices = @transform_3, window_bounds = array<i64: 1, 1>}, {transform_indices = @transform_4, window_bounds = array<i64: 32, 128>}]} {
    %c0_i32 = arith.constant 0 : i32
    %0 = arith.cmpi eq, %arg0, %c0_i32 : i32
    %1 = arith.extui %0 : i1 to i32
    %c0_i32_0 = arith.constant 0 : i32
    %2 = arith.cmpi ne, %1, %c0_i32_0 : i32
    scf.if %2 {
      %c0_i32_2 = arith.constant 0 : i32
      %6 = arith.cmpi eq, %arg1, %c0_i32_2 : i32
      %7 = arith.extui %6 : i1 to i32
      %c0_i32_3 = arith.constant 0 : i32
      %8 = arith.cmpi ne, %7, %c0_i32_3 : i32
      scf.if %8 {
        %cst_26 = arith.constant 0x7F800000 : f32
        %56 = vector.broadcast %cst_26 : f32 to vector<2x1xf32>
        %c0_27 = arith.constant 0 : index
        %c0_28 = arith.constant 0 : index
        %57 = vector.load %arg9[%c0_27, %c0_28] : memref<2x1xf32, #tpu.memory_space<vmem>>, vector<2x1xf32>
        tpu.vector_store %arg9[%c0_27, %c0_28], %56 {strides = array<i32>} : memref<2x1xf32, #tpu.memory_space<vmem>>, vector<2x1xf32>,
        %c0_i32_29 = arith.constant 0 : i32
        %58 = vector.broadcast %c0_i32_29 : i32 to vector<2x1xi32>
        %c0_30 = arith.constant 0 : index
        %c0_31 = arith.constant 0 : index
        %59 = vector.load %arg10[%c0_30, %c0_31] : memref<2x1xi32, #tpu.memory_space<vmem>>, vector<2x1xi32>
        tpu.vector_store %arg10[%c0_30, %c0_31], %58 {strides = array<i32>} : memref<2x1xi32, #tpu.memory_space<vmem>>, vector<2x1xi32>,
      } else {
      }
      %c0 = arith.constant 0 : index
      %c0_4 = arith.constant 0 : index
      %9 = vector.load %arg3[%c0, %c0_4] : memref<2x32xf32, #tpu.memory_space<vmem>>, vector<2x32xf32>
      %cst = arith.constant 9.99999997E-7 : f32
      %10 = vector.broadcast %cst : f32 to vector<2x32xf32>
      %11 = arith.addf %9, %10 : vector<2x32xf32>
      %c0_5 = arith.constant 0 : index
      %c0_6 = arith.constant 0 : index
      %12 = vector.load %arg4[%c0_5, %c0_6] : memref<32x128xf32, #tpu.memory_space<vmem>>, vector<32x128xf32>
      %cst_7 = arith.constant dense<0.000000e+00> : vector<32xf32>
      %13 = vector.multi_reduction <add>, %12, %cst_7 [1] : vector<32x128xf32> to vector<32xf32>
      %14 = vector.shape_cast %13 : vector<32xf32> to vector<32x1xf32>
      %15 = arith.mulf %12, %12 : vector<32x128xf32>
      %cst_8 = arith.constant dense<0.000000e+00> : vector<32xf32>
      %16 = vector.multi_reduction <add>, %15, %cst_8 [1] : vector<32x128xf32> to vector<32xf32>
      %17 = vector.shape_cast %16 : vector<32xf32> to vector<32x1xf32>
      %cst_9 = arith.constant 1.562500e-02 : f32
      %18 = vector.broadcast %cst_9 : f32 to vector<32x1xf32>
      %19 = arith.mulf %14, %18 : vector<32x1xf32>
      %20 = arith.mulf %14, %19 : vector<32x1xf32>
      %21 = arith.subf %17, %20 : vector<32x1xf32>
      %cst_10 = arith.constant 0.000000e+00 : f32
      %22 = vector.broadcast %cst_10 : f32 to vector<32x1xf32>
      %23 = arith.maximumf %21, %22 : vector<32x1xf32>
      %24 = tpu.transpose %19, [1, 0] : vector<32x1xf32> -> vector<1x32xf32>
      %25 = tpu.transpose %23, [1, 0] : vector<32x1xf32> -> vector<1x32xf32>
      %26 = vector.broadcast %24 : vector<1x32xf32> to vector<2x32xf32>
      %27 = arith.subf %11, %26 : vector<2x32xf32>
      %28 = arith.mulf %27, %27 : vector<2x32xf32>
      %cst_11 = arith.constant 6.400000e+01 : f32
      %29 = vector.broadcast %cst_11 : f32 to vector<2x32xf32>
      %30 = arith.mulf %29, %28 : vector<2x32xf32>
      %31 = vector.broadcast %25 : vector<1x32xf32> to vector<2x32xf32>
      %32 = arith.addf %30, %31 : vector<2x32xf32>
      %33 = tpu.iota {dimensions = array<i32: 1>} : vector<2x32xi32>
      %c32_i32 = arith.constant 32 : i32
      %34 = arith.muli %arg1, %c32_i32 : i32
      %35 = vector.broadcast %34 : i32 to vector<2x32xi32>
      %36 = arith.addi %33, %35 : vector<2x32xi32>
      %cst_12 = arith.constant dense<0x7F800000> : vector<2xf32>
      %37 = vector.multi_reduction <minimumf>, %32, %cst_12 [1] : vector<2x32xf32> to vector<2xf32>
      %38 = vector.shape_cast %37 : vector<2xf32> to vector<2x1xf32>
      %39 = vector.broadcast %38 : vector<2x1xf32> to vector<2x32xf32>
      %40 = arith.cmpf oeq, %32, %39 : vector<2x32xf32>
      %c1073741824_i32 = arith.constant 1073741824 : i32
      %41 = vector.broadcast %c1073741824_i32 : i32 to vector<2x32xi32>
      %42 = arith.select %40, %36, %41 : vector<2x32xi1>, vector<2x32xi32>
      %cst_13 = arith.constant dense<2147483647> : vector<2xi32>
      %43 = vector.multi_reduction <minsi>, %42, %cst_13 [1] : vector<2x32xi32> to vector<2xi32>
      %44 = vector.shape_cast %43 : vector<2xi32> to vector<2x1xi32>
      %c0_14 = arith.constant 0 : index
      %c0_15 = arith.constant 0 : index
      %45 = vector.load %arg9[%c0_14, %c0_15] : memref<2x1xf32, #tpu.memory_space<vmem>>, vector<2x1xf32>
      %46 = arith.cmpf olt, %38, %45 : vector<2x1xf32>
      %c0_16 = arith.constant 0 : index
      %c0_17 = arith.constant 0 : index
      %47 = vector.load %arg10[%c0_16, %c0_17] : memref<2x1xi32, #tpu.memory_space<vmem>>, vector<2x1xi32>
      %48 = arith.select %46, %44, %47 : vector<2x1xi1>, vector<2x1xi32>
      %c0_18 = arith.constant 0 : index
      %c0_19 = arith.constant 0 : index
      %49 = vector.load %arg10[%c0_18, %c0_19] : memref<2x1xi32, #tpu.memory_space<vmem>>, vector<2x1xi32>
      tpu.vector_store %arg10[%c0_18, %c0_19], %48 {strides = array<i32>} : memref<2x1xi32, #tpu.memory_space<vmem>>, vector<2x1xi32>,
      %c0_20 = arith.constant 0 : index
      %c0_21 = arith.constant 0 : index
      %50 = vector.load %arg9[%c0_20, %c0_21] : memref<2x1xf32, #tpu.memory_space<vmem>>, vector<2x1xf32>
      %51 = arith.select %46, %38, %50 : vector<2x1xi1>, vector<2x1xf32>
      %c0_22 = arith.constant 0 : index
      %c0_23 = arith.constant 0 : index
      %52 = vector.load %arg9[%c0_22, %c0_23] : memref<2x1xf32, #tpu.memory_space<vmem>>, vector<2x1xf32>
      tpu.vector_store %arg9[%c0_22, %c0_23], %51 {strides = array<i32>} : memref<2x1xf32, #tpu.memory_space<vmem>>, vector<2x1xf32>,
      %c0_i32_24 = arith.constant 0 : i32
      %53 = arith.cmpi eq, %arg1, %c0_i32_24 : i32
      %54 = arith.extui %53 : i1 to i32
      %c0_i32_25 = arith.constant 0 : i32
      %55 = arith.cmpi ne, %54, %c0_i32_25 : i32
      scf.if %55 {
        %c0_26 = arith.constant 0 : index
        %56 = memref.load %arg2[%c0_26] : memref<2xf32, #tpu.memory_space<smem>>
        %c1 = arith.constant 1 : index
        %57 = memref.load %arg2[%c1] : memref<2xf32, #tpu.memory_space<smem>>
        %c0_27 = arith.constant 0 : index
        %c0_28 = arith.constant 0 : index
        %58 = vector.load %arg9[%c0_27, %c0_28] : memref<2x1xf32, #tpu.memory_space<vmem>>, vector<2x1xf32>
        %59 = math.sqrt %58 : vector<2x1xf32>
        %60 = vector.shape_cast %59 : vector<2x1xf32> to vector<1x2x1xf32>
        %cst_29 = arith.constant dense<0.000000e+00> : vector<1xf32>
        %61 = vector.multi_reduction <add>, %60, %cst_29 [1, 2] : vector<1x2x1xf32> to vector<1xf32>
        %62 = vector.shape_cast %61 : vector<1xf32> to vector<1x1x1xf32>
        %63 = vector.extract %62[0, 0, 0] : f32 from vector<1x1x1xf32>
        %cst_30 = arith.constant 5.000000e-01 : f32
        %64 = arith.mulf %63, %cst_30 : f32
        %c0_31 = arith.constant 0 : index
        %c0_32 = arith.constant 0 : index
        %65 = memref.load %arg5[%c0_31, %c0_32] : memref<1x1xf32, #tpu.memory_space<smem>>
        memref.store %64, %arg5[%c0_31, %c0_32] : memref<1x1xf32, #tpu.memory_space<smem>>
        %c0_33 = arith.constant 0 : index
        %c0_34 = arith.constant 0 : index
        %66 = vector.load %arg10[%c0_33, %c0_34] : memref<2x1xi32, #tpu.memory_space<vmem>>, vector<2x1xi32>
        %c63_i32 = arith.constant 63 : i32
        %67 = vector.broadcast %c63_i32 : i32 to vector<2x1xi32>
        %68 = arith.minsi %66, %67 : vector<2x1xi32>
        %69 = arith.sitofp %68 : vector<2x1xi32> to vector<2x1xf32>
        %cst_35 = arith.constant 8.000000e+00 : f32
        %70 = vector.broadcast %cst_35 : f32 to vector<2x1xf32>
        %71 = arith.divf %69, %70 : vector<2x1xf32>
        %72 = math.floor %71 : vector<2x1xf32>
        %cst_36 = arith.constant 8.000000e+00 : f32
        %73 = vector.broadcast %cst_36 : f32 to vector<2x1xf32>
        %74 = arith.mulf %72, %73 : vector<2x1xf32>
        %75 = arith.subf %69, %74 : vector<2x1xf32>
        %76 = tpu.iota {dimensions = array<i32: 1>} : vector<1x128xi32>
        %77 = arith.sitofp %76 : vector<1x128xi32> to vector<1x128xf32>
        %cst_37 = arith.constant 8.000000e+00 : f32
        %78 = vector.broadcast %cst_37 : f32 to vector<1x128xf32>
        %79 = arith.divf %77, %78 : vector<1x128xf32>
        %80 = math.floor %79 : vector<1x128xf32>
        %cst_38 = arith.constant 8.000000e+00 : f32
        %81 = vector.broadcast %cst_38 : f32 to vector<1x128xf32>
        %82 = arith.mulf %80, %81 : vector<1x128xf32>
        %83 = arith.subf %77, %82 : vector<1x128xf32>
        %84 = vector.broadcast %80 : vector<1x128xf32> to vector<2x128xf32>
        %85 = vector.broadcast %72 : vector<2x1xf32> to vector<2x128xf32>
        %86 = arith.subf %84, %85 : vector<2x128xf32>
        %87 = vector.broadcast %83 : vector<1x128xf32> to vector<2x128xf32>
        %88 = vector.broadcast %75 : vector<2x1xf32> to vector<2x128xf32>
        %89 = arith.subf %87, %88 : vector<2x128xf32>
        %90 = arith.mulf %86, %86 : vector<2x128xf32>
        %91 = arith.mulf %89, %89 : vector<2x128xf32>
        %92 = arith.addf %90, %91 : vector<2x128xf32>
        %cst_39 = arith.constant 0.000000e+00 : f32
        %93 = arith.subf %cst_39, %57 : f32
        %94 = vector.broadcast %93 : f32 to vector<2x128xf32>
        %95 = arith.mulf %92, %94 : vector<2x128xf32>
        %96 = math.exp %95 : vector<2x128xf32>
        %97 = vector.broadcast %56 : f32 to vector<2x128xf32>
        %98 = arith.mulf %96, %97 : vector<2x128xf32>
        %c64_i32 = arith.constant 64 : i32
        %99 = vector.broadcast %c64_i32 : i32 to vector<1x128xi32>
        %100 = arith.cmpi slt, %76, %99 : vector<1x128xi32>
        %cst_40 = arith.constant 0.000000e+00 : f32
        %101 = vector.shape_cast %100 : vector<1x128xi1> to vector<1x128xi1>
        %102 = vector.broadcast %101 : vector<1x128xi1> to vector<2x128xi1>
        %103 = vector.broadcast %cst_40 : f32 to vector<2x128xf32>
        %104 = arith.select %102, %98, %103 : vector<2x128xi1>, vector<2x128xf32>
        %c0_41 = arith.constant 0 : index
        %c0_42 = arith.constant 0 : index
        %105 = vector.load %arg7[%c0_41, %c0_42] : memref<2x128xf32, #tpu.memory_space<vmem>>, vector<2x128xf32>
        tpu.vector_store %arg7[%c0_41, %c0_42], %104 {strides = array<i32>} : memref<2x128xf32, #tpu.memory_space<vmem>>, vector<2x128xf32>,
        %cst_43 = arith.constant dense<0.000000e+00> : vector<128xf32>
        %106 = vector.multi_reduction <add>, %104, %cst_43 [0] : vector<2x128xf32> to vector<128xf32>
        %107 = vector.shape_cast %106 : vector<128xf32> to vector<1x128xf32>
        %c0_44 = arith.constant 0 : index
        %c0_45 = arith.constant 0 : index
        %108 = vector.load %arg8[%c0_44, %c0_45] : memref<1x128xf32, #tpu.memory_space<vmem>>, vector<1x128xf32>
        tpu.vector_store %arg8[%c0_44, %c0_45], %107 {strides = array<i32>} : memref<1x128xf32, #tpu.memory_space<vmem>>, vector<1x128xf32>,
      } else {
      }
    } else {
    }
    %c1_i32 = arith.constant 1 : i32
    %3 = arith.cmpi eq, %arg0, %c1_i32 : i32
    %4 = arith.extui %3 : i1 to i32
    %c0_i32_1 = arith.constant 0 : i32
    %5 = arith.cmpi ne, %4, %c0_i32_1 : i32
    scf.if %5 {
      %c0 = arith.constant 0 : index
      %c0_2 = arith.constant 0 : index
      %6 = vector.load %arg4[%c0, %c0_2] : memref<32x128xf32, #tpu.memory_space<vmem>>, vector<32x128xf32>
      %c0_3 = arith.constant 0 : index
      %c0_4 = arith.constant 0 : index
      %7 = vector.load %arg7[%c0_3, %c0_4] : memref<2x128xf32, #tpu.memory_space<vmem>>, vector<2x128xf32>
      %c0_5 = arith.constant 0 : index
      %c0_6 = arith.constant 0 : index
      %8 = vector.load %arg3[%c0_5, %c0_6] : memref<2x32xf32, #tpu.memory_space<vmem>>, vector<2x32xf32>
      %9 = tpu.transpose %8, [1, 0] : vector<2x32xf32> -> vector<32x2xf32>
      %10 = vector.extract_strided_slice %7 {offsets = [0, 0], sizes = [1, 128], strides = [1, 1]} : vector<2x128xf32> to vector<1x128xf32>
      %11 = vector.extract_strided_slice %9 {offsets = [0, 0], sizes = [32, 1], strides = [1, 1]} : vector<32x2xf32> to vector<32x1xf32>
      %12 = vector.broadcast %11 : vector<32x1xf32> to vector<32x128xf32>
      %13 = arith.subf %12, %6 : vector<32x128xf32>
      %14 = vector.broadcast %10 : vector<1x128xf32> to vector<32x128xf32>
      %15 = arith.mulf %14, %13 : vector<32x128xf32>
      %16 = vector.extract_strided_slice %7 {offsets = [1, 0], sizes = [1, 128], strides = [1, 1]} : vector<2x128xf32> to vector<1x128xf32>
      %17 = vector.extract_strided_slice %9 {offsets = [0, 1], sizes = [32, 1], strides = [1, 1]} : vector<32x2xf32> to vector<32x1xf32>
      %18 = vector.broadcast %17 : vector<32x1xf32> to vector<32x128xf32>
      %19 = arith.subf %18, %6 : vector<32x128xf32>
      %20 = vector.broadcast %16 : vector<1x128xf32> to vector<32x128xf32>
      %21 = arith.mulf %20, %19 : vector<32x128xf32>
      %22 = arith.addf %15, %21 : vector<32x128xf32>
      %cst = arith.constant 5.000000e-01 : f32
      %23 = vector.broadcast %cst : f32 to vector<32x128xf32>
      %24 = arith.mulf %22, %23 : vector<32x128xf32>
      %25 = arith.addf %6, %24 : vector<32x128xf32>
      %c0_7 = arith.constant 0 : index
      %c0_8 = arith.constant 0 : index
      %26 = vector.load %arg6[%c0_7, %c0_8] : memref<32x128xf32, #tpu.memory_space<vmem>>, vector<32x128xf32>
      tpu.vector_store %arg6[%c0_7, %c0_8], %25 {strides = array<i32>} : memref<32x128xf32, #tpu.memory_space<vmem>>, vector<32x128xf32>,
    } else {
    }
    return
  }
  func.func @transform_0(%arg0: i32, %arg1: i32) -> i32 {
    %c0_i32 = arith.constant 0 : i32
    %c0_i32_0 = arith.constant 0 : i32
    return %c0_i32 : i32
  }
  func.func @transform_1(%arg0: i32, %arg1: i32) -> (i32, i32) {
    %c0_i32 = arith.constant 0 : i32
    %c0_i32_0 = arith.constant 0 : i32
    return %c0_i32, %arg1 : i32, i32
  }
  func.func @transform_2(%arg0: i32, %arg1: i32) -> (i32, i32) {
    %c0_i32 = arith.constant 0 : i32
    %c0_i32_0 = arith.constant 0 : i32
    return %arg1, %c0_i32 : i32, i32
  }
  func.func @transform_3(%arg0: i32, %arg1: i32) -> (i32, i32) {
    %c0_i32 = arith.constant 0 : i32
    %c0_i32_0 = arith.constant 0 : i32
    %c0_i32_1 = arith.constant 0 : i32
    return %c0_i32, %c0_i32_0 : i32, i32
  }
  func.func @transform_4(%arg0: i32, %arg1: i32) -> (i32, i32) {
    %0 = arith.muli %arg0, %arg1 : i32
    %c0_i32 = arith.constant 0 : i32
    %c0_i32_0 = arith.constant 0 : i32
    return %0, %c0_i32 : i32, i32
  }
}

</mosaic_0001>

<llo_original>
// kernel: som_forward.1
$region0: #{som_forward.1}
  #allocation0 [shape = 'u32[]', space=smem, size = 0x4, offset = 0x4, fixed_abs, tag = 'smem constant byte address 0x4 - core index']
  #allocation1 [shape = 'u32[144,128]{1,0:T(1,128)}', space=vmem, size = 0x12000, scoped, tag = 'internal scratch']
  #allocation2 [shape = 'f32[2,128]{1,0:T(2,128)}', space=vmem, size = 0x400, scoped, tag = 'scratch operand']
  #allocation3 [shape = 'f32[1,128]{1,0:T(1,128)}', space=vmem, size = 0x200, scoped, tag = 'scratch operand']
  #allocation4 [shape = 'f32[2,1]{1,0:T(2,128)}', space=vmem, size = 0x400, scoped, tag = 'scratch operand']
  #allocation5 [shape = 's32[2,1]{1,0:T(2,128)}', space=vmem, size = 0x400, scoped, tag = 'scratch operand']
  %s0 = inlined_call_operand.vmem [shape: f32[2], index: 0, kind: input, shape index: {}]
  %s1 = inlined_call_operand.vmem [shape: f32[2,32], index: 1, kind: input, shape index: {}]
  %s2 = inlined_call_operand.vmem [shape: f32[32,128], index: 2, kind: input, shape index: {}, may-alias: {2,4}]
  %s3 = inlined_call_operand.hbm [shape: f32[1,1], index: 3, kind: output, shape index: {0}]
  %s4 = inlined_call_operand.vmem [shape: f32[32,128], index: 4, kind: output, shape index: {1}, may-alias: {2,4}]
  %5 = xla_tuple %s3, %s4
  %s6 = sld [smem:[#allocation0]]
  $region73: #{som_forward.1} parent=0
    _
  %s8 = ssub.s32 1, %s6
  %s9 = scalar_select 0, %s8, %s6
  $region1: #{som_forward.1} parent=0
    #allocation6 [shape = 'u8[512]{0}', space=smem, size = 0x200, scoped, tag = 'input window, operand 0, single buffered']
    #allocation7 [shape = 's32[2]{0}', space=sflag, size = 0x8, scoped, tag = 'scoped memory for som_forward.1']
    #allocation8 [shape = 's32[2]{0}', space=sflag, size = 0x8, scoped, tag = 'scoped memory for som_forward.1']
    #allocation9 [shape = 'u8[512]{0}', space=smem, size = 0x200, scoped, tag = 'output window, operand 0, single buffered']
    %10 = vsyncpa [#allocation8], 0
    %11 = vsyncpa [#allocation7], 0
    loop: start=0, step=1, limit=4
    $region2: #{som_forward.1} parent=1 // loop_pre_header
      _
    $region3: #{som_forward.1} parent=1 // loop_header
      %s13 = sphi 0, %s17
      %p14 = scmp.ge.s32.totalorder %s13, 4
      %s20 = sphi 0, %s32
      %s21 = sphi 0, %s28
      %s22 = sphi 0, %s20
      %s23 = sphi 0, %s21
      %s24 = sphi 0, %s22
      %s25 = sphi 0, %s23
      %s33 = sphi 0, %s33
      %s35 = sphi 0, %s33
      %s36 = sphi 0, %s35
      %s50 = sphi 0, %s36
      %s56 = sphi 0, %s58
      %s59 = sphi 0, %s56
      %s60 = sphi 0, %s59
      %s76 = sphi 0, %s60
      %s82 = sphi 0, %s84
      %s85 = sphi 0, %s82
      %s86 = sphi 0, %s85
      %s102 = sphi 0, %s86
      %s106 = sphi 0, %s106
      %s108 = sphi 0, %s106
      %s109 = sphi 0, %s108
      %s123 = sphi 0, %s109
      %s131 = sphi 0, %s133
      %s134 = sphi 0, %s131
      %s135 = sphi 0, %s134
      %s151 = sphi 0, %s135
    $region4: #{som_forward.1} parent=1 // loop_header_branch
      %16 = sbr.rel (%p14) target = $region8
    $region5: #{som_forward.1} parent=1 // loop_body
      %s18 = ssub.s32 %s13, 1
      %s19 = ssub.s32 %s13, 2
      %s26 = sadd.s32 1, %s21
      %p27 = scmp.ge.s32.totalorder %s26, 1
      %s28 = scalar_select %p27, 0, %s26
      %s29 = sadd.s32 1, %s20
      %s30 = scalar_select %p27, %s29, %s20
      %p31 = scmp.ge.s32.totalorder %s30, 2
      %s32 = scalar_select %p31, 0, %s30
      %s34 = sadd.s32 %s33, 1
      %p37 = scmp.eq.s32.totalorder %s13, 1
      %p38 = scmp.ne.s32.totalorder %s33, %s35
      %p39 = scmp.eq.s32.totalorder %s13, 0
      %p40 = por %p38, %p39
      %p41 = scmp.ne.s32.totalorder %s33, %s35
      %p42 = scmp.eq.s32.totalorder %s18, 1
      %p43 = por %p41, %p42
      %p44 = scmp.ne.s32.totalorder %s35, %s36
      %p45 = scmp.eq.s32.totalorder %s18, 0
      %p46 = por %p44, %p45
      %p47 = scmp.ne.s32.totalorder %s35, %s36
      %p48 = scmp.eq.s32.totalorder %s19, 1
      %p49 = por %p47, %p48
      %p51 = scmp.ne.s32.totalorder %s36, %s50
      %p52 = scmp.eq.s32.totalorder %s19, 0
      %p53 = por %p51, %p52
      %s54 = ssub.s32 %s21, %s28
      %p55 = scmp.eq.s32.totalorder %s54, 0
      %s57 = sadd.s32 %s56, 1
      %s58 = scalar_select %p55, %s56, %s57
      %p61 = pneg %p55
      %p62 = scmp.eq.s32.totalorder %s13, 1
      %p63 = por %p61, %p62
      %p64 = scmp.ne.s32.totalorder %s56, %s59
      %p65 = scmp.eq.s32.totalorder %s13, 0
      %p66 = por %p64, %p65
      %p67 = scmp.ne.s32.totalorder %s56, %s59
      %p68 = scmp.eq.s32.totalorder %s18, 1
      %p69 = por %p67, %p68
      %p70 = scmp.ne.s32.totalorder %s59, %s60
      %p71 = scmp.eq.s32.totalorder %s18, 0
      %p72 = por %p70, %p71
      %p73 = scmp.ne.s32.totalorder %s59, %s60
      %p74 = scmp.eq.s32.totalorder %s19, 1
      %p75 = por %p73, %p74
      %p77 = scmp.ne.s32.totalorder %s60, %s76
      %p78 = scmp.eq.s32.totalorder %s19, 0
      %p79 = por %p77, %p78
      %s80 = ssub.s32 %s21, %s28
      %p81 = scmp.eq.s32.totalorder %s80, 0
      %s83 = sadd.s32 %s82, 1
      %s84 = scalar_select %p81, %s82, %s83
      %p87 = pneg %p81
      %p88 = scmp.eq.s32.totalorder %s13, 1
      %p89 = por %p87, %p88
      %p90 = scmp.ne.s32.totalorder %s82, %s85
      %p91 = scmp.eq.s32.totalorder %s13, 0
      %p92 = por %p90, %p91
      %p93 = scmp.ne.s32.totalorder %s82, %s85
      %p94 = scmp.eq.s32.totalorder %s18, 1
      %p95 = por %p93, %p94
      %p96 = scmp.ne.s32.totalorder %s85, %s86
      %p97 = scmp.eq.s32.totalorder %s18, 0
      %p98 = por %p96, %p97
      %p99 = scmp.ne.s32.totalorder %s85, %s86
      %p100 = scmp.eq.s32.totalorder %s19, 1
      %p101 = por %p99, %p100
      %p103 = scmp.ne.s32.totalorder %s86, %s102
      %p104 = scmp.eq.s32.totalorder %s19, 0
      %p105 = por %p103, %p104
      %s107 = sadd.s32 %s106, 1
      %p110 = scmp.eq.s32.totalorder %s13, 1
      %p111 = scmp.ne.s32.totalorder %s106, %s108
      %p112 = scmp.eq.s32.totalorder %s13, 0
      %p113 = por %p111, %p112
      %p114 = scmp.ne.s32.totalorder %s106, %s108
      %p115 = scmp.eq.s32.totalorder %s18, 1
      %p116 = por %p114, %p115
      %p117 = scmp.ne.s32.totalorder %s108, %s109
      %p118 = scmp.eq.s32.totalorder %s18, 0
      %p119 = por %p117, %p118
      %p120 = scmp.ne.s32.totalorder %s108, %s109
      %p121 = scmp.eq.s32.totalorder %s19, 1
      %p122 = por %p120, %p121
      %p124 = scmp.ne.s32.totalorder %s109, %s123
      %p125 = scmp.eq.s32.totalorder %s19, 0
      %p126 = por %p124, %p125
      %s127 = smul.u32 %s20, %s21
      %s128 = smul.u32 %s32, %s28
      %s129 = ssub.s32 %s127, %s128
      %p130 = scmp.eq.s32.totalorder %s129, 0
      %s132 = sadd.s32 %s131, 1
      %s133 = scalar_select %p130, %s131, %s132
      %p136 = pneg %p130
      %p137 = scmp.eq.s32.totalorder %s13, 1
      %p138 = por %p136, %p137
      %p139 = scmp.ne.s32.totalorder %s131, %s134
      %p140 = scmp.eq.s32.totalorder %s13, 0
      %p141 = por %p139, %p140
      %p142 = scmp.ne.s32.totalorder %s131, %s134
      %p143 = scmp.eq.s32.totalorder %s18, 1
      %p144 = por %p142, %p143
      %p145 = scmp.ne.s32.totalorder %s134, %s135
      %p146 = scmp.eq.s32.totalorder %s18, 0
      %p147 = por %p145, %p146
      %p148 = scmp.ne.s32.totalorder %s134, %s135
      %p149 = scmp.eq.s32.totalorder %s19, 1
      %p150 = por %p148, %p149
      %p152 = scmp.ne.s32.totalorder %s135, %s151
      %p153 = scmp.eq.s32.totalorder %s19, 0
      %p154 = por %p152, %p153
      %p155 = scmp.le.s32.totalorder 1, %s13
      %p156 = scmp.lt.s32.totalorder %s13, 3
      %p157 = pnand %p155, %p156
      %p158 = pneg %p157
      // Predicated region
      $region9: #{som_forward.1} parent=5 // pred_check
        _
      $region10: #{som_forward.1} parent=5 // pred_check_branch
        %160 = sbr.rel (%p157) target = $region12
      $region11: #{som_forward.1} parent=5 // pred_region
        %s161 = ssub.s32 %s13, 1
        // Predicated region
        $region13: #{som_forward.1} parent=11 // pred_check
          %p162 = pneg %p46
        $region14: #{som_forward.1} parent=11 // pred_check_branch
          %164 = sbr.rel (%p162) target = $region16
        $region15: #{som_forward.1} parent=11 // pred_region
          %s166 = ssub.s32 16, 16
          %167 = vsyncadd [#allocation8], %s166
          %s169 = sshll.u32 %s0, 4
          %s170 = int_to_ptr.vmem [resolvable:$true] %s169
          %172 = dma.vmem_to_smem %s170, 16, [#allocation6], [#allocation8]
        $region16: #{som_forward.1} parent=11 // pred_fallthru
          _
        // Predicated region
        $region17: #{som_forward.1} parent=11 // pred_check
          %p173 = pneg %p72
        $region18: #{som_forward.1} parent=11 // pred_check_branch
          %175 = sbr.rel (%p173) target = $region20
        $region19: #{som_forward.1} parent=11 // pred_region
          %p176 = scmp.lt.s32.totalorder %s23, 0
          %s177 = scalar_select %p176, %s23, 0
          %s178 = smul.addr %s177, 2
          %s179 = scalar_lea.vmem %s1, %s178
        $region20: #{som_forward.1} parent=11 // pred_fallthru
          _
        // Predicated region
        $region21: #{som_forward.1} parent=11 // pred_check
          %p180 = pneg %p98
        $region22: #{som_forward.1} parent=11 // pred_check_branch
          %182 = sbr.rel (%p180) target = $region24
        $region23: #{som_forward.1} parent=11 // pred_region
          %s183 = smul.u32 4, %s23
          %p184 = scmp.lt.s32.totalorder %s183, 3
          %s185 = scalar_select %p184, %s183, 3
          %s186 = smul.addr %s185, 8
          %s187 = scalar_lea.vmem %s2, %s186
          %s188 = smul.u32 4, %s23
        $region24: #{som_forward.1} parent=11 // pred_fallthru
          _
      $region12: #{som_forward.1} parent=5 // pred_fallthru
        _
      %p189 = scmp.lt.s32.totalorder %s13, 2
      // Predicated region
      $region25: #{som_forward.1} parent=5 // pred_check
        %p190 = pneg %p189
      $region26: #{som_forward.1} parent=5 // pred_check_branch
        %192 = sbr.rel (%p190) target = $region28
      $region27: #{som_forward.1} parent=5 // pred_region
        _
      $region28: #{som_forward.1} parent=5 // pred_fallthru
        _
      %p193 = scmp.le.s32.totalorder 1, %s13
      %p194 = scmp.lt.s32.totalorder %s13, 3
      %p195 = pnand %p193, %p194
      %p196 = pneg %p195
      // Predicated region
      $region29: #{som_forward.1} parent=5 // pred_check
        _
      $region30: #{som_forward.1} parent=5 // pred_check_branch
        %198 = sbr.rel (%p195) target = $region32
      $region31: #{som_forward.1} parent=5 // pred_region
        %s199 = ssub.s32 %s13, 1
        // Predicated region
        $region33: #{som_forward.1} parent=31 // pred_check
          %p200 = pneg %p46
        $region34: #{som_forward.1} parent=31 // pred_check_branch
          %202 = sbr.rel (%p200) target = $region36
        $region35: #{som_forward.1} parent=31 // pred_region
          %203 = dma.done [#allocation8], 16
        $region36: #{som_forward.1} parent=31 // pred_fallthru
          _
        %204 = sfence
        %p205 = pneg %p46
        %p206 = pneg %p43
        %p207 = scmp.lt.s32.totalorder %s23, 0
        %s208 = scalar_select %p207, %s23, 0
        %s209 = smul.addr %s208, 2
        %s210 = scalar_lea.vmem %s1, %s209
        %p211 = pneg %p72
        %p212 = pneg %p69
        %s213 = smul.u32 4, %s23
        %p214 = scmp.lt.s32.totalorder %s213, 3
        %s215 = scalar_select %p214, %s213, 3
        %s216 = smul.addr %s215, 8
        %s217 = scalar_lea.vmem %s2, %s216
        %p218 = pneg %p98
        %p219 = pneg %p95
        %p220 = pneg %p119
        %p221 = pneg %p116
        %p222 = pneg %p147
        %p223 = pneg %p144
        %s224 = smul.u32 %s22, %s23
        %s225 = smul.u32 4, %s224
        %p226 = scmp.lt.s32.totalorder %s225, 3
        %s227 = scalar_select %p226, %s225, 3
        %s228 = smul.addr %s227, 8
        %s229 = scalar_lea.vmem %s4, %s228
        %p230 = scmp.lt.s32.totalorder %s23, 0
        %s231 = scalar_select %p230, %s23, 0
        %s232 = smul.addr %s231, 2
        %s233 = scalar_lea.vmem %s1, %s232
        %s234 = smul.u32 4, %s23
        %p235 = scmp.lt.s32.totalorder %s234, 3
        %s236 = scalar_select %p235, %s234, 3
        %s237 = smul.addr %s236, 8
        %s238 = scalar_lea.vmem %s2, %s237
        %s239 = smul.u32 4, %s23
        %s240 = smul.u32 %s22, %s23
        %s241 = smul.u32 4, %s240
        %p242 = scmp.lt.s32.totalorder %s241, 3
        %s243 = scalar_select %p242, %s241, 3
        %s244 = smul.addr %s243, 8
        %s245 = scalar_lea.vmem %s4, %s244
        %s246 = smul.u32 %s22, %s23
        %s247 = smul.u32 4, %s246
        %p248 = scmp.eq.s32.totalorder %s22, 0
        // Predicated region
        $region37: #{som_forward.1} parent=31 // pred_check
          %p249 = pneg %p248
        $region38: #{som_forward.1} parent=31 // pred_check_branch
          %251 = sbr.rel (%p249) target = $region40
        $region39: #{som_forward.1} parent=31 // pred_region
          %p252 = scmp.eq.s32.totalorder %s23, 0
          // Predicated region
          $region41: #{som_forward.1} parent=39 // pred_check
            %p253 = pneg %p252
          $region42: #{som_forward.1} parent=39 // pred_check_branch
            %255 = sbr.rel (%p253) target = $region44
          $region43: #{som_forward.1} parent=39 // pred_region
            %vm256 = vcmask 1024
            %257 = vst.msk [vmem:[#allocation4] sm:$0x3] %vm256, inf
            %258 = vst.msk [vmem:[#allocation5] sm:$0x3] %vm256, 0
          $region44: #{som_forward.1} parent=39 // pred_fallthru
            _
          %v259 = vld [vmem:[%s233] sm:$0x3]
          %v260 = vadd.f32 %v259, 1e-06
          %v261 = vld [vmem:[%s238] sm:$0xff]
          %v262 = vld [vmem:[%s238 + $0x8] sm:$0xff]
          %v263 = vld [vmem:[%s238 + $0x10] sm:$0xff]
          %v264 = vld [vmem:[%s238 + $0x18] sm:$0xff]
          %265 = vadd.xlane.f32.xlu0 %v261
          %v266 = vpop.xlane.xlu0 %265
          %267 = vadd.xlane.f32.xlu0 %v262
          %v268 = vpop.xlane.xlu0 %267
          %269 = vadd.xlane.f32.xlu0 %v263
          %v270 = vpop.xlane.xlu0 %269
          %271 = vadd.xlane.f32.xlu0 %v264
          %v272 = vpop.xlane.xlu0 %271
          %v273 = vmul.f32 %v261, %v261
          %v274 = vmul.f32 %v262, %v262
          %v275 = vmul.f32 %v263, %v263
          %v276 = vmul.f32 %v264, %v264
          %277 = vadd.xlane.f32.xlu0 %v273
          %v278 = vpop.xlane.xlu0 %277
          %279 = vadd.xlane.f32.xlu0 %v274
          %v280 = vpop.xlane.xlu0 %279
          %281 = vadd.xlane.f32.xlu0 %v275
          %v282 = vpop.xlane.xlu0 %281
          %283 = vadd.xlane.f32.xlu0 %v276
          %v284 = vpop.xlane.xlu0 %283
          %v285 = vmul.f32 %v266, 0.015625
          %v286 = vmul.f32 %v268, 0.015625
          %v287 = vmul.f32 %v270, 0.015625
          %v288 = vmul.f32 %v272, 0.015625
          %v289 = vmul.f32 %v266, %v285
          %v290 = vmul.f32 %v268, %v286
          %v291 = vmul.f32 %v270, %v287
          %v292 = vmul.f32 %v272, %v288
          %v293 = vsub.f32 %v278, %v289
          %v294 = vsub.f32 %v280, %v290
          %v295 = vsub.f32 %v282, %v291
          %v296 = vsub.f32 %v284, %v292
          %v297 = vmax.f32 %v293, 0.0
          %v298 = vmax.f32 %v294, 0.0
          %v299 = vmax.f32 %v295, 0.0
          %v300 = vmax.f32 %v296, 0.0
          %301 = vxpose.xlu0.b32.start [1/16] %v285, 128
          %302 = vxpose.xlu0.b32.cont [2/16] %v286, 128
          %303 = vxpose.xlu0.b32.cont [3/16] %v287, 128
          %304 = vxpose.xlu0.b32.cont [4/16] %v288, 128
          %305 = vxpose.xlu0.b32.cont [5/16] 0.0, 128
          %306 = vxpose.xlu0.b32.cont [6/16] 0.0, 128
          %307 = vxpose.xlu0.b32.cont [7/16] 0.0, 128
          %308 = vxpose.xlu0.b32.cont [8/16] 0.0, 128
          %309 = vxpose.xlu0.b32.cont [9/16] 0.0, 128
          %310 = vxpose.xlu0.b32.cont [10/16] 0.0, 128
          %311 = vxpose.xlu0.b32.cont [11/16] 0.0, 128
          %312 = vxpose.xlu0.b32.cont [12/16] 0.0, 128
          %313 = vxpose.xlu0.b32.cont [13/16] 0.0, 128
          %314 = vxpose.xlu0.b32.cont [14/16] 0.0, 128
          %315 = vxpose.xlu0.b32.cont [15/16] 0.0, 128
          %316 = vxpose.xlu0.b32.end [16/16] 0.0, 128
          %v317 = vpop.trf.xlu0
          %v318 = vpop.trf.xlu0
          %v319 = vpop.trf.xlu0
          %v320 = vpop.trf.xlu0
          %v321 = vpop.trf.xlu0
          %v322 = vpop.trf.xlu0
          %v323 = vpop.trf.xlu0
          %v324 = vpop.trf.xlu0
          %v325 = vpop.trf.xlu0
          %v326 = vpop.trf.xlu0
          %v327 = vpop.trf.xlu0
          %v328 = vpop.trf.xlu0
          %v329 = vpop.trf.xlu0
          %v330 = vpop.trf.xlu0
          %v331 = vpop.trf.xlu0
          %v332 = vpop.trf.xlu0
          %333 = vxpose.xlu0.b32.start [1/16] %v297, 128
          %334 = vxpose.xlu0.b32.cont [2/16] %v298, 128
          %335 = vxpose.xlu0.b32.cont [3/16] %v299, 128
          %336 = vxpose.xlu0.b32.cont [4/16] %v300, 128
          %337 = vxpose.xlu0.b32.cont [5/16] 0.0, 128
          %338 = vxpose.xlu0.b32.cont [6/16] 0.0, 128
          %339 = vxpose.xlu0.b32.cont [7/16] 0.0, 128
          %340 = vxpose.xlu0.b32.cont [8/16] 0.0, 128
          %341 = vxpose.xlu0.b32.cont [9/16] 0.0, 128
          %342 = vxpose.xlu0.b32.cont [10/16] 0.0, 128
          %343 = vxpose.xlu0.b32.cont [11/16] 0.0, 128
          %344 = vxpose.xlu0.b32.cont [12/16] 0.0, 128
          %345 = vxpose.xlu0.b32.cont [13/16] 0.0, 128
          %346 = vxpose.xlu0.b32.cont [14/16] 0.0, 128
          %347 = vxpose.xlu0.b32.cont [15/16] 0.0, 128
          %348 = vxpose.xlu0.b32.end [16/16] 0.0, 128
          %v349 = vpop.trf.xlu0
          %v350 = vpop.trf.xlu0
          %v351 = vpop.trf.xlu0
          %v352 = vpop.trf.xlu0
          %v353 = vpop.trf.xlu0
          %v354 = vpop.trf.xlu0
          %v355 = vpop.trf.xlu0
          %v356 = vpop.trf.xlu0
          %v357 = vpop.trf.xlu0
          %v358 = vpop.trf.xlu0
          %v359 = vpop.trf.xlu0
          %v360 = vpop.trf.xlu0
          %v361 = vpop.trf.xlu0
          %v362 = vpop.trf.xlu0
          %v363 = vpop.trf.xlu0
          %v364 = vpop.trf.xlu0
          %v365 = vlaneseq
          %v366 = vshrl.u32 %v365, 7
          %v367 = vsub.s32 0, %v366
          %v368 = vrot.slane %v317, %v367
          %v369 = vsub.f32 %v260, %v368
          %v370 = vmul.f32 %v369, %v369
          %v371 = vmul.f32 %v370, 64.0
          %v372 = vlaneseq
          %v373 = vshrl.u32 %v372, 7
          %v374 = vsub.s32 0, %v373
          %v375 = vrot.slane %v349, %v374
          %v376 = vadd.f32 %v371, %v375
          %v377 = vlaneseq
          %v378 = vand.u32 %v377, 127
          %s379 = smul.u32 %s23, 32
          %v380 = vstv %s379
          %v381 = vadd.s32 %v378, %v380
          %vm382 = vcmask 254976
          %v383 = vsel %vm382, %v376, inf
          %384 = vmin.xlane.f32.xlu0 %v383
          %v385 = vpop.xlane.xlu0 %384
          %vm386 = vcmp.eq.f32.partialorder %v376, %v385
          %v387 = vsel %vm386, %v381, 1073741824
          %v388 = vsel %vm382, %v387, 2147483647
          %v389 = vand.u32 %v388, 65535
          %v390 = vshra.s32 %v388, 16
          %v391 = vcvt.s32.f32 %v389
          %v392 = vcvt.s32.f32 %v390
          %393 = vmin.xlane.f32.xlu0 %v392
          %v394 = vpop.xlane.xlu0 %393
          %vm395 = vcmp.eq.f32.partialorder %v392, %v394
          %v396 = vsel %vm395, %v391, inf
          %397 = vmin.xlane.f32.xlu0 %v396
          %v398 = vpop.xlane.xlu0 %397
          %v399 = vcvt.f32.s32 %v398
          %v400 = vcvt.f32.s32 %v394
          %v401 = vshll.u32 %v400, 16
          %v402 = vadd.s32 %v401, %v399
          %v403 = vld [vmem:[#allocation4] sm:$0x3]
          %vm404 = vcmp.lt.f32.partialorder %v385, %v403
          %v405 = vld [vmem:[#allocation5] sm:$0x3]
          %v406 = vsel %vm404, %v402, %v405
          %vm407 = vcmask 1024
          %408 = vst.msk [vmem:[#allocation5] sm:$0x3] %vm407, %v406
          %v409 = vld [vmem:[#allocation4] sm:$0x3]
          %v410 = vsel %vm404, %v385, %v409
          %411 = vst.msk [vmem:[#allocation4] sm:$0x3] %vm407, %v410
          // Predicated region
          $region45: #{som_forward.1} parent=39 // pred_check
            %p412 = pneg %p252
          $region46: #{som_forward.1} parent=39 // pred_check_branch
            %414 = sbr.rel (%p412) target = $region48
          $region47: #{som_forward.1} parent=39 // pred_region
            %s415 = sld [smem:[#allocation6]]
            %s416 = sld [smem:[#allocation6 + $0x1]]
            %v417 = vld [vmem:[#allocation4] sm:$0x3]
            %v418 = vrsqrt.pop %v417
            %v419 = vmul.f32 %v417, %v418
            %vm420 = vcmp.eq.f32.partialorder %v417, inf
            %v421 = vsel %vm420, %v417, %v419
            %vm422 = vcmp.eq.f32.partialorder %v417, 0.0
            %v423 = vand.u32 %v417, 2147483648
            %v424 = vsel %vm422, %v423, %v421
            %v425 = vsel %vm407, %v424, 0.0
            %426 = vadd.xlane.f32.xlu0 %v425
            %v427 = vpop.xlane.xlu0 %426
            %v428 = vrot.slane %v427, 4
            %v429 = vadd.f32 %v427, %v428
            %v430 = vrot.slane %v429, 2
            %v431 = vadd.f32 %v429, %v430
            %v432 = vrot.slane %v431, 1
            %v433 = vadd.f32 %v431, %v432
            %s434 = vtos %v433
            %s435 = smul.f32 %s434, 0.5
            %s436 = scalar_lea.smem [#allocation9], 0
            %437 = sst [smem:[%s436]] %s435
            %v438 = vld [vmem:[#allocation5] sm:$0x3]
            %vm439 = vcmp.lt.s32.totalorder %v438, 63
            %v440 = vsel %vm439, %v438, 63
            %v441 = vcvt.s32.f32 %v440
            %v442 = vrcp.pop 8.0
            %v443 = vmul.f32 %v441, %v442
            %v444 = vfloor.f32 %v443
            %v445 = vmul.f32 %v444, 8.0
            %v446 = vsub.f32 %v441, %v445
            %v447 = vcvt.s32.f32 %v378
            %v448 = vmul.f32 %v447, %v442
            %v449 = vfloor.f32 %v448
            %v450 = vmul.f32 %v449, 8.0
            %v451 = vsub.f32 %v447, %v450
            %453 = vset.pattern.permute.xlu0 0
            %454 = vperm.xlu0 %453, %v444
            %v455 = vpop.permute.xlu0 %454
            %v457 = vsub.f32 %v449, %v455
            %459 = vset.pattern.permute.xlu0 0
            %460 = vperm.xlu0 %459, %v446
            %v461 = vpop.permute.xlu0 %460
            %v463 = vsub.f32 %v451, %v461
            %v464 = vmul.f32 %v457, %v457
            %v465 = vmul.f32 %v463, %v463
            %v466 = vadd.f32 %v464, %v465
            %s467 = ssub.f32 0.0, %s416
            %v468 = vstv %s467
            %v469 = vmul.f32 %v466, %v468
            %v470 = vmul.f32 %v469, 1.442695
            %v471 = vpow.pop %v470
            %v472 = vstv %s415
            %v473 = vmul.f32 %v471, %v472
            %vm474 = vcmp.lt.s32.totalorder %v378, 64
            %v475 = vsel %vm474, 1, 0
            %vm476 = vcmp.eq.s32.totalorder %v475, 1
            %v477 = vsel %vm476, %v473, 0.0
            %478 = vst [vmem:[#allocation2] sm:$0x3] %v477
            %vm479 = vcmask 1041408
            %v480 = vsel %vm479, %v477, 0.0
            %v481 = vrot.slane %v480, 4
            %v482 = vadd.f32 %v480, %v481
            %v483 = vrot.slane %v482, 2
            %v484 = vadd.f32 %v482, %v483
            %v485 = vrot.slane %v484, 1
            %v486 = vadd.f32 %v484, %v485
            %487 = vst [vmem:[#allocation3] sm:$0x1] %v486
          $region48: #{som_forward.1} parent=39 // pred_fallthru
            _
        $region40: #{som_forward.1} parent=31 // pred_fallthru
          _
        %p488 = scmp.eq.s32.totalorder %s22, 1
        // Predicated region
        $region49: #{som_forward.1} parent=31 // pred_check
          %p489 = pneg %p488
        $region50: #{som_forward.1} parent=31 // pred_check_branch
          %491 = sbr.rel (%p489) target = $region52
        $region51: #{som_forward.1} parent=31 // pred_region
          %v492 = vld [vmem:[%s238] sm:$0xff]
          %v493 = vld [vmem:[%s238 + $0x8] sm:$0xff]
          %v494 = vld [vmem:[%s238 + $0x10] sm:$0xff]
          %v495 = vld [vmem:[%s238 + $0x18] sm:$0xff]
          %v496 = vld [vmem:[#allocation2] sm:$0x3]
          %v497 = vld [vmem:[%s233] sm:$0x3]
          %498 = vxpose.xlu0.b32.start [1/16] %v497, 128
          %499 = vxpose.xlu0.b32.cont [2/16] 0.0, 128
          %500 = vxpose.xlu0.b32.cont [3/16] 0.0, 128
          %501 = vxpose.xlu0.b32.cont [4/16] 0.0, 128
          %502 = vxpose.xlu0.b32.cont [5/16] 0.0, 128
          %503 = vxpose.xlu0.b32.cont [6/16] 0.0, 128
          %504 = vxpose.xlu0.b32.cont [7/16] 0.0, 128
          %505 = vxpose.xlu0.b32.cont [8/16] 0.0, 128
          %506 = vxpose.xlu0.b32.cont [9/16] 0.0, 128
          %507 = vxpose.xlu0.b32.cont [10/16] 0.0, 128
          %508 = vxpose.xlu0.b32.cont [11/16] 0.0, 128
          %509 = vxpose.xlu0.b32.cont [12/16] 0.0, 128
          %510 = vxpose.xlu0.b32.cont [13/16] 0.0, 128
          %511 = vxpose.xlu0.b32.cont [14/16] 0.0, 128
          %512 = vxpose.xlu0.b32.cont [15/16] 0.0, 128
          %513 = vxpose.xlu0.b32.end [16/16] 0.0, 128
          %v514 = vpop.trf.xlu0
          %v515 = vpop.trf.xlu0
          %v516 = vpop.trf.xlu0
          %v517 = vpop.trf.xlu0
          %v518 = vpop.trf.xlu0
          %v519 = vpop.trf.xlu0
          %v520 = vpop.trf.xlu0
          %v521 = vpop.trf.xlu0
          %v522 = vpop.trf.xlu0
          %v523 = vpop.trf.xlu0
          %v524 = vpop.trf.xlu0
          %v525 = vpop.trf.xlu0
          %v526 = vpop.trf.xlu0
          %v527 = vpop.trf.xlu0
          %v528 = vpop.trf.xlu0
          %v529 = vpop.trf.xlu0
          %531 = vset.pattern.permute.xlu0 0
          %532 = vperm.xlu0 %531, %v514
          %v533 = vpop.permute.xlu0 %532
          %536 = vset.pattern.permute.xlu0 0
          %537 = vperm.xlu0 %536, %v515
          %v538 = vpop.permute.xlu0 %537
          %541 = vset.pattern.permute.xlu0 0
          %542 = vperm.xlu0 %541, %v516
          %v543 = vpop.permute.xlu0 %542
          %546 = vset.pattern.permute.xlu0 0
          %547 = vperm.xlu0 %546, %v517
          %v548 = vpop.permute.xlu0 %547
          %v550 = vsub.f32 %v533, %v492
          %v551 = vsub.f32 %v538, %v493
          %v552 = vsub.f32 %v543, %v494
          %v553 = vsub.f32 %v548, %v495
          %v554 = vlaneseq
          %v555 = vshrl.u32 %v554, 7
          %v556 = vsub.s32 0, %v555
          %v557 = vrot.slane %v496, %v556
          %v558 = vmul.f32 %v557, %v550
          %v559 = vmul.f32 %v557, %v551
          %v560 = vmul.f32 %v557, %v552
          %v561 = vmul.f32 %v557, %v553
          %562 = vset.pattern.permute.xlu0 1
          %563 = vperm.xlu0 %562, %v514
          %v564 = vpop.permute.xlu0 %563
          %566 = vset.pattern.permute.xlu0 1
          %567 = vperm.xlu0 %566, %v515
          %v568 = vpop.permute.xlu0 %567
          %570 = vset.pattern.permute.xlu0 1
          %571 = vperm.xlu0 %570, %v516
          %v572 = vpop.permute.xlu0 %571
          %574 = vset.pattern.permute.xlu0 1
          %575 = vperm.xlu0 %574, %v517
          %v576 = vpop.permute.xlu0 %575
          %v578 = vsub.f32 %v564, %v492
          %v579 = vsub.f32 %v568, %v493
          %v580 = vsub.f32 %v572, %v494
          %v581 = vsub.f32 %v576, %v495
          %v582 = vlaneseq
          %v583 = vshrl.u32 %v582, 7
          %v584 = vsub.s32 1, %v583
          %v585 = vrot.slane %v496, %v584
          %v586 = vmul.f32 %v585, %v578
          %v587 = vmul.f32 %v585, %v579
          %v588 = vmul.f32 %v585, %v580
          %v589 = vmul.f32 %v585, %v581
          %v590 = vadd.f32 %v558, %v586
          %v591 = vadd.f32 %v559, %v587
          %v592 = vadd.f32 %v560, %v588
          %v593 = vadd.f32 %v561, %v589
          %v594 = vmul.f32 %v590, 0.5
          %v595 = vmul.f32 %v591, 0.5
          %v596 = vmul.f32 %v592, 0.5
          %v597 = vmul.f32 %v593, 0.5
          %v598 = vadd.f32 %v492, %v594
          %v599 = vadd.f32 %v493, %v595
          %v600 = vadd.f32 %v494, %v596
          %v601 = vadd.f32 %v495, %v597
          %602 = vst [vmem:[%s245] sm:$0xff] %v598
          %603 = vst [vmem:[%s245 + $0x8] sm:$0xff] %v599
          %604 = vst [vmem:[%s245 + $0x10] sm:$0xff] %v600
          %605 = vst [vmem:[%s245 + $0x18] sm:$0xff] %v601
        $region52: #{som_forward.1} parent=31 // pred_fallthru
          _
        %s606 = smul.u32 %s22, %s23
        %s607 = smul.u32 4, %s606
        %p608 = scmp.lt.s32.totalorder %s607, 3
        %s609 = scalar_select %p608, %s607, 3
        %s610 = smul.addr %s609, 8
        %s611 = scalar_lea.vmem %s4, %s610
        // Predicated region
        $region53: #{som_forward.1} parent=31 // pred_check
          %p612 = pneg %p116
        $region54: #{som_forward.1} parent=31 // pred_check_branch
          %614 = sbr.rel (%p612) target = $region56
        $region55: #{som_forward.1} parent=31 // pred_region
          %s616 = ssub.s32 16, 16
          %617 = vsyncadd [#allocation7], %s616
          %620 = dma.smem_to_hbm [#allocation9], 16, %s3, [#allocation7]
        $region56: #{som_forward.1} parent=31 // pred_fallthru
          _
        // Predicated region
        $region57: #{som_forward.1} parent=31 // pred_check
          %p621 = pneg %p144
        $region58: #{som_forward.1} parent=31 // pred_check_branch
          %623 = sbr.rel (%p621) target = $region60
        $region59: #{som_forward.1} parent=31 // pred_region
          %s624 = smul.u32 %s22, %s23
          %s625 = smul.u32 4, %s624
        $region60: #{som_forward.1} parent=31 // pred_fallthru
          _
        // Predicated region
        $region61: #{som_forward.1} parent=31 // pred_check
          %p626 = pneg %p116
        $region62: #{som_forward.1} parent=31 // pred_check_branch
          %628 = sbr.rel (%p626) target = $region64
        $region63: #{som_forward.1} parent=31 // pred_region
          %629 = dma.done [#allocation7], 16
        $region64: #{som_forward.1} parent=31 // pred_fallthru
          _
        %630 = sfence
      $region32: #{som_forward.1} parent=5 // pred_fallthru
        _
      %p631 = scmp.le.s32.totalorder 2, %s13
      // Predicated region
      $region65: #{som_forward.1} parent=5 // pred_check
        %p632 = pneg %p631
      $region66: #{som_forward.1} parent=5 // pred_check_branch
        %634 = sbr.rel (%p632) target = $region68
      $region67: #{som_forward.1} parent=5 // pred_region
        %s635 = ssub.s32 %s13, 2
        // Predicated region
        $region69: #{som_forward.1} parent=67 // pred_check
          %p636 = pneg %p150
        $region70: #{som_forward.1} parent=67 // pred_check_branch
          %638 = sbr.rel (%p636) target = $region72
        $region71: #{som_forward.1} parent=67 // pred_region
          %s639 = smul.u32 %s24, %s25
          %s640 = smul.u32 4, %s639
          %p641 = scmp.lt.s32.totalorder %s640, 3
          %s642 = scalar_select %p641, %s640, 3
          %s643 = smul.addr %s642, 8
          %s644 = scalar_lea.vmem %s4, %s643
        $region72: #{som_forward.1} parent=67 // pred_fallthru
          _
      $region68: #{som_forward.1} parent=5 // pred_fallthru
        _
    $region6: #{som_forward.1} parent=1 // loop_footer
      %s17 = sadd.s32 1, %s13
    $region7: #{som_forward.1} parent=1 // loop_footer_branch
      %12 = sbr.rel target = $region3
    $region8: #{som_forward.1} parent=1 // loop_exit
      _
    %645 = vsyncpa [#allocation7], 1
    %s646 = scalar_lea.sflag [#allocation7], 1
    %647 = vsyncpa %s646, 1
    %648 = vsyncpa [#allocation8], 1
    %s649 = scalar_lea.sflag [#allocation8], 1
    %650 = vsyncpa %s649, 1

</llo_original>
